<compile_context>
chip_gen: v6e
topology: v6e:2x2x1
jax: 0.10.0
libtpu: 0.0.40
codegen_flags: <defaults>
</compile_context>

<pallas_src>
import functools

import jax
import jax.numpy as jnp
from jax import lax
from jax.experimental import pallas as pl
from jax.experimental.pallas import tpu as pltpu


# --------------------------------------------------------------------------- #
# Kernels
# --------------------------------------------------------------------------- #
def _sobel_flat_kernel(x_ref, o_ref, *, h, w):
    """Block (B, H*W): each sublane row is one whole image, flattened row-major.

    Requires W to be a power of two (column index computed with a bitwise AND).
    All shifts are lane rolls; boundary handling is 4 selects against iota masks.
    """
    hw = h * w
    x = x_ref[...]

    # Lane-position masks, built once per grid step; broadcast over the B rows.
    p = lax.broadcasted_iota(jnp.int32, (1, hw), 1)
    col = p & (w - 1)                      # p % W  (W is a power of two)
    zero = jnp.float32(0.0)

    # ---- W direction: smooth s = [1,2,1], diff d = [-1,0,1], zero padded ----
    xl = jnp.where(col == 0, zero, pltpu.roll(x, shift=1 % hw, axis=1))
    xr = jnp.where(col == w - 1, zero, pltpu.roll(x, shift=(hw - 1) % hw, axis=1))
    s = xl + x + x + xr
    d = xr - xl

    # ---- H direction: neighbours are +-W lanes away in the flattened row ----
    def up(a):   # a[h-1, :], zero for h == 0
        return jnp.where(p < w, zero, pltpu.roll(a, shift=w % hw, axis=1))

    def dn(a):   # a[h+1, :], zero for h == H-1
        return jnp.where(p >= hw - w, zero, pltpu.roll(a, shift=(hw - w) % hw, axis=1))

    gv = dn(s) - up(s)                     # vertical Sobel  ([1,2,1]^T x [-1,0,1])^T
    gh = up(d) + d + d + dn(d)             # horizontal Sobel
    o_ref[...] = jnp.sqrt(gv * gv + gh * gh + 1e-6).astype(o_ref.dtype)


def _sobel_3d_kernel(x_ref, o_ref):
    """Block (B, H, W) fallback for W that is not a power of two.

    W-shifts are lane rolls, H-shifts are sublane rolls; same roll+mask scheme.
    """
    _, H, W = o_ref.shape
    x = x_ref[...]
    colm = lax.broadcasted_iota(jnp.int32, (1, 1, W), 2)
    rowm = lax.broadcasted_iota(jnp.int32, (1, H, 1), 1)
    zero = jnp.float32(0.0)

    xl = jnp.where(colm == 0, zero, pltpu.roll(x, shift=1 % W, axis=2))
    xr = jnp.where(colm == W - 1, zero, pltpu.roll(x, shift=(W - 1) % W, axis=2))
    s = xl + x + x + xr
    d = xr - xl

    def up(a):
        return jnp.where(rowm == 0, zero, pltpu.roll(a, shift=1 % H, axis=1))

    def dn(a):
        return jnp.where(rowm == H - 1, zero, pltpu.roll(a, shift=(H - 1) % H, axis=1))

    gv = dn(s) - up(s)
    gh = up(d) + d + d + dn(d)
    o_ref[...] = jnp.sqrt(gv * gv + gh * gh + 1e-6).astype(o_ref.dtype)


# --------------------------------------------------------------------------- #
# Wrapper
# --------------------------------------------------------------------------- #
def _vmem_capacity_bytes():
    try:
        return int(pltpu.get_tpu_info().vmem_capacity_bytes)
    except Exception:
        return 64 * 1024 * 1024  # conservative default (v7x per-TensorCore)


def _pick_block_images(nc, per_img_bytes, budget_bytes, align8):
    """Number of images per block under a VMEM budget, cdiv-friendly."""
    b = max(1, budget_bytes // per_img_bytes)
    if nc >= 2:
        b = min(b, pl.cdiv(nc, 2))   # >= 2 grid steps so both v7x TCs get work
    b = min(b, nc)
    if align8 and b < nc:
        # Block sublane dim must be a multiple of 8 (or equal the full dim).
        b = (b // 8) * 8 if b >= 8 else min(8, nc)
    return int(b)


def get_gradient(x: jax.Array) -> jax.Array:
    """x: (N, C, H, W) -> (N, C, H, W) float32 Sobel gradient magnitude."""
    assert x.ndim == 4
    n, c, h, w = x.shape
    x = x.astype(jnp.float32)
    nc = n * c
    hw = h * w
    per_img_bytes = hw * 4

    vmem_cap = _vmem_capacity_bytes()
    vmem_limit = min(vmem_cap // 2, 64 * 1024 * 1024)
    # Block + live roll/mask temporaries + double-buffered in/out ~= 12x block bytes.
    block_budget = max(1 << 20, vmem_limit // 12)

    # TODO(synk): images larger than ~block_budget (e.g. 1024x1024 f32 on v7x) need an
    # H-tiling grid axis with a 2-row halo (manual make_async_copy) to stay in VMEM.

    use_flat = (w & (w - 1)) == 0  # power-of-two W -> lane-dense flattened layout
    if use_flat:
        xf = x.reshape(nc, hw)                       # contiguous reshape: free
        b = _pick_block_images(nc, per_img_bytes, block_budget, align8=True)
        grid = (pl.cdiv(nc, b),)
        kern = functools.partial(_sobel_flat_kernel, h=h, w=w)
        in_spec = pl.BlockSpec((b, hw), lambda i: (i, 0))
        out_spec = pl.BlockSpec((b, hw), lambda i: (i, 0))
        out_shape = jax.ShapeDtypeStruct((nc, hw), jnp.float32)
    else:
        xf = x.reshape(nc, h, w)
        b = _pick_block_images(nc, per_img_bytes, block_budget, align8=False)
        grid = (pl.cdiv(nc, b),)
        kern = _sobel_3d_kernel
        in_spec = pl.BlockSpec((b, h, w), lambda i: (i, 0, 0))
        out_spec = pl.BlockSpec((b, h, w), lambda i: (i, 0, 0))
        out_shape = jax.ShapeDtypeStruct((nc, h, w), jnp.float32)

    cost = pl.CostEstimate(
        flops=20 * nc * hw,
        transcendentals=nc * hw,
        bytes_accessed=8 * nc * hw,
    )

    out = pl.pallas_call(
        kern,
        out_shape=out_shape,
        grid_spec=pltpu.PrefetchScalarGridSpec(
            num_scalar_prefetch=0,
            grid=grid,
            in_specs=[in_spec],
            out_specs=out_spec,
        ),
        compiler_params=pltpu.CompilerParams(
            dimension_semantics=("parallel",),
            vmem_limit_bytes=vmem_limit,
        ),
        cost_estimate=cost,
    )(xf)
    return out.reshape(n, c, h, w)


# --------------------------------------------------------------------------- #
# Pure-JAX reference (mirrors the PyTorch forward) and test
# --------------------------------------------------------------------------- #
def _reference(x):
    kernel_v = jnp.array([[-1., -2., -1.],
                          [0., 0., 0.],
                          [1., 2., 1.]], dtype=jnp.float32)[None, None]
    kernel_h = jnp.array([[-1., 0., 1.],
                          [-2., 0., 2.],
                          [-1., 0., 1.]], dtype=jnp.float32)[None, None]
    outs = []
    for i in range(x.shape[1]):
        xi = x[:, i:i + 1]
        dn = lax.conv_dimension_numbers(xi.shape, kernel_v.shape,
                                        ("NCHW", "OIHW", "NCHW"))
        xv = lax.conv_general_dilated(xi, kernel_v, (1, 1), ((1, 1), (1, 1)),
                                      dimension_numbers=dn)
        xh = lax.conv_general_dilated(xi, kernel_h, (1, 1), ((1, 1), (1, 1)),
                                      dimension_numbers=dn)
        outs.append(jnp.sqrt(xv * xv + xh * xh + 1e-6))
    return jnp.concatenate(outs, axis=1)


if __name__ == "__main__":
    key = jax.random.PRNGKey(0)
    n, c, h, w = 2, 4, 16, 16
    x = jax.random.normal(key, (n, c, h, w), dtype=jnp.float32)

    y = jax.block_until_ready(get_gradient(x))
    y_ref = jax.block_until_ready(_reference(x))
    assert y.shape == (n, c, h, w)
    assert jnp.allclose(y, y_ref, atol=1e-4, rtol=1e-4), "mismatch vs reference (main)"

    # Ragged cdiv-grid path: NC=9 does not divide the block size of 8 images.
    x2 = jax.random.normal(jax.random.PRNGKey(1), (3, 3, 8, 16), dtype=jnp.float32)
    y2 = jax.block_until_ready(get_gradient(x2))
    y2_ref = jax.block_until_ready(_reference(x2))
    assert jnp.allclose(y2, y2_ref, atol=1e-4, rtol=1e-4), "mismatch vs reference (ragged)"

    print("KERNEL_OK")
</pallas_src>

<mosaic_0001>
module attributes {stable_mosaic.version = 11 : i64} {
  func.func @_sobel_flat_kernel(%arg0: i32, %arg1: memref<8x256xf32, #tpu.memory_space<vmem>>, %arg2: memref<8x256xf32, #tpu.memory_space<vmem>>) attributes {dimension_semantics = [#tpu.dimension_semantics<parallel>], iteration_bounds = array<i64: 1>, scalar_prefetch = 0 : i64, scratch_operands = 0 : i64, tpu.core_type = #tpu.core_type<tc>, window_params = [{transform_indices = @transform_0, window_bounds = array<i64: 8, 256>}, {transform_indices = @transform_1, window_bounds = array<i64: 8, 256>}]} {
    %c0 = arith.constant 0 : index
    %c0_0 = arith.constant 0 : index
    %0 = vector.load %arg1[%c0, %c0_0] : memref<8x256xf32, #tpu.memory_space<vmem>>, vector<8x256xf32>
    %1 = tpu.iota {dimensions = array<i32: 1>} : vector<1x256xi32>
    %c15_i32 = arith.constant 15 : i32
    %2 = vector.broadcast %c15_i32 : i32 to vector<1x256xi32>
    %3 = arith.andi %1, %2 : vector<1x256xi32>
    %c0_i32 = arith.constant 0 : i32
    %4 = vector.broadcast %c0_i32 : i32 to vector<1x256xi32>
    %5 = arith.cmpi eq, %3, %4 : vector<1x256xi32>
    %c1_i32 = arith.constant 1 : i32
    %6 = tpu.dynamic_rotate %0 by %c1_i32 dim 1 : vector<8x256xf32>, i32 -> vector<8x256xf32>
    %cst = arith.constant 0.000000e+00 : f32
    %7 = vector.shape_cast %5 : vector<1x256xi1> to vector<1x256xi1>
    %8 = vector.broadcast %7 : vector<1x256xi1> to vector<8x256xi1>
    %9 = vector.broadcast %cst : f32 to vector<8x256xf32>
    %10 = arith.select %8, %9, %6 : vector<8x256xi1>, vector<8x256xf32>
    %c15_i32_1 = arith.constant 15 : i32
    %11 = vector.broadcast %c15_i32_1 : i32 to vector<1x256xi32>
    %12 = arith.cmpi eq, %3, %11 : vector<1x256xi32>
    %c255_i32 = arith.constant 255 : i32
    %13 = tpu.dynamic_rotate %0 by %c255_i32 dim 1 : vector<8x256xf32>, i32 -> vector<8x256xf32>
    %cst_2 = arith.constant 0.000000e+00 : f32
    %14 = vector.shape_cast %12 : vector<1x256xi1> to vector<1x256xi1>
    %15 = vector.broadcast %14 : vector<1x256xi1> to vector<8x256xi1>
    %16 = vector.broadcast %cst_2 : f32 to vector<8x256xf32>
    %17 = arith.select %15, %16, %13 : vector<8x256xi1>, vector<8x256xf32>
    %18 = arith.addf %10, %0 : vector<8x256xf32>
    %19 = arith.addf %18, %0 : vector<8x256xf32>
    %20 = arith.addf %19, %17 : vector<8x256xf32>
    %21 = arith.subf %17, %10 : vector<8x256xf32>
    %c240_i32 = arith.constant 240 : i32
    %22 = vector.broadcast %c240_i32 : i32 to vector<1x256xi32>
    %23 = arith.cmpi sge, %1, %22 : vector<1x256xi32>
    %c240_i32_3 = arith.constant 240 : i32
    %24 = tpu.dynamic_rotate %20 by %c240_i32_3 dim 1 : vector<8x256xf32>, i32 -> vector<8x256xf32>
    %cst_4 = arith.constant 0.000000e+00 : f32
    %25 = vector.shape_cast %23 : vector<1x256xi1> to vector<1x256xi1>
    %26 = vector.broadcast %25 : vector<1x256xi1> to vector<8x256xi1>
    %27 = vector.broadcast %cst_4 : f32 to vector<8x256xf32>
    %28 = arith.select %26, %27, %24 : vector<8x256xi1>, vector<8x256xf32>
    %c16_i32 = arith.constant 16 : i32
    %29 = vector.broadcast %c16_i32 : i32 to vector<1x256xi32>
    %30 = arith.cmpi slt, %1, %29 : vector<1x256xi32>
    %c16_i32_5 = arith.constant 16 : i32
    %31 = tpu.dynamic_rotate %20 by %c16_i32_5 dim 1 : vector<8x256xf32>, i32 -> vector<8x256xf32>
    %cst_6 = arith.constant 0.000000e+00 : f32
    %32 = vector.shape_cast %30 : vector<1x256xi1> to vector<1x256xi1>
    %33 = vector.broadcast %32 : vector<1x256xi1> to vector<8x256xi1>
    %34 = vector.broadcast %cst_6 : f32 to vector<8x256xf32>
    %35 = arith.select %33, %34, %31 : vector<8x256xi1>, vector<8x256xf32>
    %36 = arith.subf %28, %35 : vector<8x256xf32>
    %c16_i32_7 = arith.constant 16 : i32
    %37 = vector.broadcast %c16_i32_7 : i32 to vector<1x256xi32>
    %38 = arith.cmpi slt, %1, %37 : vector<1x256xi32>
    %c16_i32_8 = arith.constant 16 : i32
    %39 = tpu.dynamic_rotate %21 by %c16_i32_8 dim 1 : vector<8x256xf32>, i32 -> vector<8x256xf32>
    %cst_9 = arith.constant 0.000000e+00 : f32
    %40 = vector.shape_cast %38 : vector<1x256xi1> to vector<1x256xi1>
    %41 = vector.broadcast %40 : vector<1x256xi1> to vector<8x256xi1>
    %42 = vector.broadcast %cst_9 : f32 to vector<8x256xf32>
    %43 = arith.select %41, %42, %39 : vector<8x256xi1>, vector<8x256xf32>
    %44 = arith.addf %43, %21 : vector<8x256xf32>
    %45 = arith.addf %44, %21 : vector<8x256xf32>
    %c240_i32_10 = arith.constant 240 : i32
    %46 = vector.broadcast %c240_i32_10 : i32 to vector<1x256xi32>
    %47 = arith.cmpi sge, %1, %46 : vector<1x256xi32>
    %c240_i32_11 = arith.constant 240 : i32
    %48 = tpu.dynamic_rotate %21 by %c240_i32_11 dim 1 : vector<8x256xf32>, i32 -> vector<8x256xf32>
    %cst_12 = arith.constant 0.000000e+00 : f32
    %49 = vector.shape_cast %47 : vector<1x256xi1> to vector<1x256xi1>
    %50 = vector.broadcast %49 : vector<1x256xi1> to vector<8x256xi1>
    %51 = vector.broadcast %cst_12 : f32 to vector<8x256xf32>
    %52 = arith.select %50, %51, %48 : vector<8x256xi1>, vector<8x256xf32>
    %53 = arith.addf %45, %52 : vector<8x256xf32>
    %54 = arith.mulf %36, %36 : vector<8x256xf32>
    %55 = arith.mulf %53, %53 : vector<8x256xf32>
    %56 = arith.addf %54, %55 : vector<8x256xf32>
    %cst_13 = arith.constant 9.99999997E-7 : f32
    %57 = vector.broadcast %cst_13 : f32 to vector<8x256xf32>
    %58 = arith.addf %56, %57 : vector<8x256xf32>
    %59 = math.sqrt %58 : vector<8x256xf32>
    %c0_14 = arith.constant 0 : index
    %c0_15 = arith.constant 0 : index
    %60 = vector.load %arg2[%c0_14, %c0_15] : memref<8x256xf32, #tpu.memory_space<vmem>>, vector<8x256xf32>
    tpu.vector_store %arg2[%c0_14, %c0_15], %59 {strides = array<i32>} : memref<8x256xf32, #tpu.memory_space<vmem>>, vector<8x256xf32>,
    return
  }
  func.func @transform_0(%arg0: i32) -> (i32, i32) {
    %c0_i32 = arith.constant 0 : i32
    %c0_i32_0 = arith.constant 0 : i32
    return %arg0, %c0_i32 : i32, i32
  }
  func.func @transform_1(%arg0: i32) -> (i32, i32) {
    %c0_i32 = arith.constant 0 : i32
    %c0_i32_0 = arith.constant 0 : i32
    return %arg0, %c0_i32 : i32, i32
  }
}

</mosaic_0001>

<llo_original>
// kernel: tpu_custom_call.1
$region0: #{tpu_custom_call.1}
  #allocation0 [shape = 'u32[]', space=smem, size = 0x4, offset = 0x4, fixed_abs, tag = 'smem constant byte address 0x4 - core index']
  #allocation1 [shape = 'u32[144,128]{1,0:T(1,128)}', space=vmem, size = 0x12000, scoped, tag = 'internal scratch']
  %s0 = inlined_call_operand.hbm [shape: f32[8,256], index: 0, kind: input, shape index: {}]
  %s1 = inlined_call_operand.hbm [shape: f32[8,256], index: 1, kind: output, shape index: {}]
  %s2 = sld [smem:[#allocation0]]
  $region18: #{tpu_custom_call.1} parent=0
    _
  %s4 = ssub.s32 1, %s2
  %s5 = scalar_select 0, %s4, %s2
  $region1: #{tpu_custom_call.1} parent=0
    #allocation2 [shape = 'u8[8192]{0}', space=vmem, size = 0x2000, scoped, tag = 'input window, operand 0, single buffered']
    #allocation3 [shape = 's32[1]{0}', space=sflag, size = 0x4, scoped, tag = 'scoped memory for tpu_custom_call.1']
    #allocation4 [shape = 's32[1]{0}', space=sflag, size = 0x4, scoped, tag = 'scoped memory for tpu_custom_call.1']
    #allocation5 [shape = 'u8[8192]{0}', space=vmem, size = 0x2000, scoped, tag = 'output window, operand 0, single buffered']
    %6 = vsyncpa [#allocation3], 0
    %7 = vsyncpa [#allocation4], 0
    // Predicated region
    $region2: #{tpu_custom_call.1} parent=1 // pred_check
      _
    $region3: #{tpu_custom_call.1} parent=1 // pred_check_branch
      %9 = sbr.rel (0) target = $region5
    $region4: #{tpu_custom_call.1} parent=1 // pred_region
      %s11 = ssub.s32 256, 256
      %12 = vsyncadd [#allocation3], %s11
      %s14 = sshll.u32 [#allocation2], 4
      %s15 = int_to_ptr.vmem [resolvable:$true] %s14
      %17 = dma.hbm_to_vmem [thread:$0]  %s0, 256, %s15, [#allocation3]
    $region5: #{tpu_custom_call.1} parent=1 // pred_fallthru
      _
    // Predicated region
    $region6: #{tpu_custom_call.1} parent=1 // pred_check
      _
    $region7: #{tpu_custom_call.1} parent=1 // pred_check_branch
      %19 = sbr.rel (0) target = $region9
    $region8: #{tpu_custom_call.1} parent=1 // pred_region
      %20 = dma.done [#allocation3], 256
    $region9: #{tpu_custom_call.1} parent=1 // pred_fallthru
      _
    %v21 = vld [vmem:[#allocation2] sm:$0xff]
    %v22 = vld [vmem:[#allocation2 + $0x8] sm:$0xff]
    %v23 = vlaneseq
    %v24 = vand.u32 %v23, 127
    %v25 = vadd.s32 %v24, 128
    %v26 = vand.u32 %v24, 15
    %v27 = vand.u32 %v25, 15
    %vm28 = vcmp.eq.s32.totalorder %v26, 0
    %vm29 = vcmp.eq.s32.totalorder %v27, 0
    %30 = vrot.lane.b32.xlu0 %v21, 1
    %v31 = vpop.permute.xlu0 %30
    %32 = vrot.lane.b32.xlu0 %v22, 1
    %v33 = vpop.permute.xlu0 %32
    %vm34 = vcmp.lt.s32.totalorder %v24, 1
    %v35 = vsel %vm34, %v31, %v33
    %v36 = vsel %vm34, %v33, %v31
    %v37 = vsel %vm28, 1, 0
    %v38 = vsel %vm29, 1, 0
    %vm39 = vcmp.eq.s32.totalorder %v37, 1
    %vm40 = vcmp.eq.s32.totalorder %v38, 1
    %v41 = vsel %vm39, 0.0, %v36
    %v42 = vsel %vm40, 0.0, %v35
    %vm43 = vcmp.eq.s32.totalorder %v26, 15
    %vm44 = vcmp.eq.s32.totalorder %v27, 15
    %45 = vrot.lane.b32.xlu0 %v21, 127
    %v46 = vpop.permute.xlu0 %45
    %47 = vrot.lane.b32.xlu0 %v22, 127
    %v48 = vpop.permute.xlu0 %47
    %vm49 = vcmp.lt.s32.totalorder %v24, 127
    %v50 = vsel %vm49, %v46, %v48
    %v51 = vsel %vm49, %v48, %v46
    %v52 = vsel %vm43, 1, 0
    %v53 = vsel %vm44, 1, 0
    %vm54 = vcmp.eq.s32.totalorder %v52, 1
    %vm55 = vcmp.eq.s32.totalorder %v53, 1
    %v56 = vsel %vm54, 0.0, %v50
    %v57 = vsel %vm55, 0.0, %v51
    %v58 = vadd.f32 %v41, %v21
    %v59 = vadd.f32 %v42, %v22
    %v60 = vadd.f32 %v58, %v21
    %v61 = vadd.f32 %v59, %v22
    %v62 = vadd.f32 %v60, %v56
    %v63 = vadd.f32 %v61, %v57
    %v64 = vsub.f32 %v56, %v41
    %v65 = vsub.f32 %v57, %v42
    %vm66 = vcmp.ge.s32.totalorder %v24, 240
    %vm67 = vcmp.ge.s32.totalorder %v25, 240
    %68 = vrot.lane.b32.xlu0 %v62, 112
    %v69 = vpop.permute.xlu0 %68
    %70 = vrot.lane.b32.xlu0 %v63, 112
    %v71 = vpop.permute.xlu0 %70
    %vm72 = vcmp.lt.s32.totalorder %v24, 112
    %v73 = vsel %vm72, %v69, %v71
    %v74 = vsel %vm72, %v71, %v69
    %v75 = vsel %vm66, 1, 0
    %v76 = vsel %vm67, 1, 0
    %vm77 = vcmp.eq.s32.totalorder %v75, 1
    %vm78 = vcmp.eq.s32.totalorder %v76, 1
    %v79 = vsel %vm77, 0.0, %v73
    %v80 = vsel %vm78, 0.0, %v74
    %vm81 = vcmp.lt.s32.totalorder %v24, 16
    %vm82 = vcmp.lt.s32.totalorder %v25, 16
    %83 = vrot.lane.b32.xlu0 %v62, 16
    %v84 = vpop.permute.xlu0 %83
    %85 = vrot.lane.b32.xlu0 %v63, 16
    %v86 = vpop.permute.xlu0 %85
    %v87 = vsel %vm81, %v84, %v86
    %v88 = vsel %vm81, %v86, %v84
    %v89 = vsel %vm81, 1, 0
    %v90 = vsel %vm82, 1, 0
    %vm91 = vcmp.eq.s32.totalorder %v89, 1
    %vm92 = vcmp.eq.s32.totalorder %v90, 1
    %v93 = vsel %vm91, 0.0, %v88
    %v94 = vsel %vm92, 0.0, %v87
    %v95 = vsub.f32 %v79, %v93
    %v96 = vsub.f32 %v80, %v94
    %97 = vrot.lane.b32.xlu0 %v64, 16
    %v98 = vpop.permute.xlu0 %97
    %99 = vrot.lane.b32.xlu0 %v65, 16
    %v100 = vpop.permute.xlu0 %99
    %v101 = vsel %vm81, %v98, %v100
    %v102 = vsel %vm81, %v100, %v98
    %v103 = vsel %vm91, 0.0, %v102
    %v104 = vsel %vm92, 0.0, %v101
    %v105 = vadd.f32 %v103, %v64
    %v106 = vadd.f32 %v104, %v65
    %v107 = vadd.f32 %v105, %v64
    %v108 = vadd.f32 %v106, %v65
    %109 = vrot.lane.b32.xlu0 %v64, 112
    %v110 = vpop.permute.xlu0 %109
    %111 = vrot.lane.b32.xlu0 %v65, 112
    %v112 = vpop.permute.xlu0 %111
    %v113 = vsel %vm72, %v110, %v112
    %v114 = vsel %vm72, %v112, %v110
    %v115 = vsel %vm77, 0.0, %v113
    %v116 = vsel %vm78, 0.0, %v114
    %v117 = vadd.f32 %v107, %v115
    %v118 = vadd.f32 %v108, %v116
    %v119 = vmul.f32 %v95, %v95
    %v120 = vmul.f32 %v96, %v96
    %v121 = vmul.f32 %v117, %v117
    %v122 = vmul.f32 %v118, %v118
    %v123 = vadd.f32 %v119, %v121
    %v124 = vadd.f32 %v120, %v122
    %v125 = vadd.f32 %v123, 1e-06
    %v126 = vadd.f32 %v124, 1e-06
    %v127 = vrsqrt.pop %v125
    %v128 = vmul.f32 %v125, %v127
    %vm129 = vcmp.eq.f32.partialorder %v125, inf
    %v130 = vsel %vm129, %v125, %v128
    %vm131 = vcmp.eq.f32.partialorder %v125, 0.0
    %v132 = vand.u32 %v125, 2147483648
    %v133 = vsel %vm131, %v132, %v130
    %v134 = vrsqrt.pop %v126
    %v135 = vmul.f32 %v126, %v134
    %vm136 = vcmp.eq.f32.partialorder %v126, inf
    %v137 = vsel %vm136, %v126, %v135
    %vm138 = vcmp.eq.f32.partialorder %v126, 0.0
    %v139 = vand.u32 %v126, 2147483648
    %v140 = vsel %vm138, %v139, %v137
    %141 = vst [vmem:[#allocation5] sm:$0xff] %v133
    %142 = vst [vmem:[#allocation5 + $0x8] sm:$0xff] %v140
    // Predicated region
    $region10: #{tpu_custom_call.1} parent=1 // pred_check
      _
    $region11: #{tpu_custom_call.1} parent=1 // pred_check_branch
      %144 = sbr.rel (0) target = $region13
    $region12: #{tpu_custom_call.1} parent=1 // pred_region
      %s146 = ssub.s32 256, 256
      %147 = vsyncadd [#allocation4], %s146
      %s149 = sshll.u32 [#allocation5], 4
      %s150 = int_to_ptr.vmem [resolvable:$true] %s149
      %152 = dma.vmem_to_hbm [thread:$0]  %s150, 256, %s1, [#allocation4]
    $region13: #{tpu_custom_call.1} parent=1 // pred_fallthru
      _
    // Predicated region
    $region14: #{tpu_custom_call.1} parent=1 // pred_check
      _
    $region15: #{tpu_custom_call.1} parent=1 // pred_check_branch
      %154 = sbr.rel (0) target = $region17
    $region16: #{tpu_custom_call.1} parent=1 // pred_region
      %155 = dma.done [#allocation4], 256
    $region17: #{tpu_custom_call.1} parent=1 // pred_fallthru
      _
    %156 = vsyncpa [#allocation3], 1
    %157 = vsyncpa [#allocation4], 1

</llo_original>
